<compile_context>
chip_gen: v5e
topology: v5e:2x2
jax: 0.10.0
libtpu: 0.0.40
codegen_flags: <defaults>
</compile_context>

<pallas_src>
from functools import partial

import jax
import jax.numpy as jnp
from jax.experimental import pallas as pl
from jax.experimental.pallas import tpu as pltpu


def _pad8(n):
    return ((n + 7) // 8) * 8


def _pad128(n):
    return ((n + 127) // 128) * 128


# ----------------------------------------------------------------------------
# Kernel
# ----------------------------------------------------------------------------
def _actor_loss_kernel(x_ref, idx_ref, p_ref, out_ref, *, off, inv_b):
    """x_ref: VMEM (B, K) f32 (zero-padded state‖action);
    idx_ref: VMEM (B, 1) int32; p_ref: VMEM packed slab; out_ref: SMEM (1,1)."""
    K = x_ref.shape[1]                 # pad8(S) + pad8(A), multiple of 8
    ncol = p_ref.shape[1]              # lane-dense width, multiple of 128

    # Static, sublane-aligned slices of the packed parameter slab.
    w1 = p_ref[off["w1"]:off["w1"] + K, :]        # (K, ncol)
    b1 = p_ref[off["b1"]:off["b1"] + 1, :]        # (1, ncol), 8-aligned start
    w2 = p_ref[off["w2"]:off["w2"] + ncol, :]     # (ncol, ncol)
    b2 = p_ref[off["b2"]:off["b2"] + 1, :]
    w3 = p_ref[off["w3"]:off["w3"] + ncol, :]     # (ncol, ncol)
    b3 = p_ref[off["b3"]:off["b3"] + 1, :]

    # Layer 1: single matmul (state‖action already fused and zero-padded).
    h1 = jnp.maximum(
        jnp.dot(x_ref[...], w1, preferred_element_type=jnp.float32) + b1, 0.0)
    h2 = jnp.maximum(
        jnp.dot(h1, w2, preferred_element_type=jnp.float32) + b2, 0.0)
    q_all = jnp.dot(h2, w3, preferred_element_type=jnp.float32) + b3   # (B, ncol)

    # Per-row head selection: one broadcast compare (no per-row unroll).
    col = jax.lax.broadcasted_iota(jnp.int32, q_all.shape, 1)
    mask = col == idx_ref[...]                                         # (B, ncol)

    # loss = -mean(selected q): single fused masked reduce, scalar to SMEM.
    out_ref[0, 0] = -jnp.sum(jnp.where(mask, q_all, 0.0)) * inv_b


# ----------------------------------------------------------------------------
# Wrapper
# ----------------------------------------------------------------------------
def actor_loss(action, state, idxs, packed_params, meta):
    """ActorLoss.forward(arg=action, state, idxs) -> scalar loss."""
    B = state.shape[0]
    sp, K, ncol = meta["sp"], meta["K"], meta["ncol"]

    # Lay state and action into one zero-padded, sublane-aligned (B, K) buffer
    # (one input DMA, one layer-1 matmul).  Cheap XLA fusion at these sizes;
    # ideally the replay buffer / actor output already use this layout.
    x = jnp.zeros((B, K), jnp.float32)
    x = x.at[:, :state.shape[1]].set(state.astype(jnp.float32))
    x = x.at[:, sp:sp + action.shape[1]].set(action.astype(jnp.float32))

    flops = 2 * B * ncol * (K + 2 * ncol)
    bytes_accessed = 4 * (B * K + B + packed_params.size + 1)

    kernel = partial(_actor_loss_kernel, off=meta["off"], inv_b=1.0 / B)
    out = pl.pallas_call(
        kernel,
        out_shape=jax.ShapeDtypeStruct((1, 1), jnp.float32),
        in_specs=[
            pl.BlockSpec(memory_space=pltpu.MemorySpace.VMEM),   # x (B, K)
            pl.BlockSpec(memory_space=pltpu.MemorySpace.VMEM),   # idx (B, 1)
            pl.BlockSpec(memory_space=pltpu.MemorySpace.VMEM),   # packed params
        ],
        out_specs=pl.BlockSpec(memory_space=pltpu.MemorySpace.SMEM),
        cost_estimate=pl.CostEstimate(
            flops=flops, transcendentals=0, bytes_accessed=bytes_accessed),
    )(x, idxs.astype(jnp.int32).reshape(B, 1), packed_params)
    return out[0, 0]


# ----------------------------------------------------------------------------
# Parameter construction / one-time packing (off the hot path)
# ----------------------------------------------------------------------------
def init_critic_params(key, in_dim, h1, h2, n_tasks):
    k1, k2, k3 = jax.random.split(key, 3)
    w1 = jax.random.normal(k1, (in_dim, h1), jnp.float32) / jnp.sqrt(in_dim)
    b1 = jnp.zeros((1, h1), jnp.float32)
    w2 = jax.random.normal(k2, (h1, h2), jnp.float32) / jnp.sqrt(h1)
    b2 = jnp.zeros((1, h2), jnp.float32)
    w3 = jax.random.normal(k3, (h2, n_tasks), jnp.float32) / jnp.sqrt(h2)
    b3 = jnp.zeros((1, n_tasks), jnp.float32)
    return (w1, b1, w2, b2, w3, b3)


def pack_critic_params(params, s_dim, a_dim):
    """Pack weights/biases into one zero-padded, lane-dense (mult-of-128 cols),
    sublane-aligned (mult-of-8 row offsets) f32 slab. Padding MUST stay zero."""
    w1, b1, w2, b2, w3, b3 = params
    in_dim, h1 = w1.shape
    assert in_dim == s_dim + a_dim
    _, h2 = w2.shape
    _, n_tasks = w3.shape

    ncol = _pad128(max(h1, h2, n_tasks))       # lane-dense feature width
    sp, ap = _pad8(s_dim), _pad8(a_dim)
    K = sp + ap                                # fused input width

    off, r = {}, 0

    def alloc(name, nrows):
        nonlocal r
        off[name] = r
        r += _pad8(nrows)

    alloc("w1", K)       # state rows at [0:s_dim], action rows at [sp:sp+a_dim]
    alloc("b1", 1)
    alloc("w2", ncol)
    alloc("b2", 1)
    alloc("w3", ncol)
    alloc("b3", 1)

    slab = jnp.zeros((r, ncol), jnp.float32)
    slab = slab.at[off["w1"]:off["w1"] + s_dim, :h1].set(w1[:s_dim])
    slab = slab.at[off["w1"] + sp:off["w1"] + sp + a_dim, :h1].set(w1[s_dim:])
    slab = slab.at[off["b1"], :h1].set(b1.reshape(-1))
    slab = slab.at[off["w2"]:off["w2"] + h1, :h2].set(w2)
    slab = slab.at[off["b2"], :h2].set(b2.reshape(-1))
    slab = slab.at[off["w3"]:off["w3"] + h2, :n_tasks].set(w3)
    slab = slab.at[off["b3"], :n_tasks].set(b3.reshape(-1))

    meta = {"off": off, "ncol": ncol, "K": K, "sp": sp, "ap": ap,
            "n_rows": r, "n_tasks": n_tasks}
    return slab, meta


# ----------------------------------------------------------------------------
if __name__ == "__main__":
    key = jax.random.PRNGKey(0)
    k_s, k_a, k_i, k_p = jax.random.split(key, 4)

    B, S_DIM, A_DIM = 8, 12, 4
    H1, H2, N_TASKS = 32, 32, 4

    state = jax.random.normal(k_s, (B, S_DIM), jnp.float32)
    action = jax.random.normal(k_a, (B, A_DIM), jnp.float32)   # "arg" in forward
    idxs = jax.random.randint(k_i, (B,), 0, N_TASKS, jnp.int32)
    # Caller-side contract check (kernel silently selects 0 for bad idx).
    assert bool(jnp.all((idxs >= 0) & (idxs < N_TASKS)))

    params = init_critic_params(k_p, S_DIM + A_DIM, H1, H2, N_TASKS)
    slab, meta = pack_critic_params(params, S_DIM, A_DIM)   # one-time packing

    loss = actor_loss(action, state, idxs, slab, meta)
    jax.block_until_ready(loss)

    # sanity check against plain-JAX reference
    x = jnp.concatenate([state, action], axis=1)
    h1 = jnp.maximum(x @ params[0] + params[1], 0.0)
    h2 = jnp.maximum(h1 @ params[2] + params[3], 0.0)
    q_all = h2 @ params[4] + params[5]
    ref = -jnp.mean(q_all[jnp.arange(B), idxs])
    assert jnp.allclose(loss, ref, atol=1e-5, rtol=1e-5), (loss, ref)

    print("KERNEL_OK")
</pallas_src>

<mosaic_0001>
module attributes {stable_mosaic.version = 11 : i64} {
  func.func @_actor_loss_kernel(%arg0: memref<8x24xf32, #tpu.memory_space<vmem>>, %arg1: memref<8x1xi32, #tpu.memory_space<vmem>>, %arg2: memref<304x128xf32, #tpu.memory_space<vmem>>, %arg3: memref<1x1xf32, #tpu.memory_space<smem>>) attributes {dimension_semantics = [], scalar_prefetch = 0 : i64, scratch_operands = 0 : i64, tpu.core_type = #tpu.core_type<tc>} {
    %c0 = arith.constant 0 : index
    %c0_0 = arith.constant 0 : index
    %0 = vector.load %arg2[%c0, %c0_0] : memref<304x128xf32, #tpu.memory_space<vmem>>, vector<24x128xf32>
    %c24 = arith.constant 24 : index
    %c0_1 = arith.constant 0 : index
    %1 = vector.load %arg2[%c24, %c0_1] : memref<304x128xf32, #tpu.memory_space<vmem>>, vector<1x128xf32>
    %c32 = arith.constant 32 : index
    %c0_2 = arith.constant 0 : index
    %2 = vector.load %arg2[%c32, %c0_2] : memref<304x128xf32, #tpu.memory_space<vmem>>, vector<128x128xf32>
    %c160 = arith.constant 160 : index
    %c0_3 = arith.constant 0 : index
    %3 = vector.load %arg2[%c160, %c0_3] : memref<304x128xf32, #tpu.memory_space<vmem>>, vector<1x128xf32>
    %c168 = arith.constant 168 : index
    %c0_4 = arith.constant 0 : index
    %4 = vector.load %arg2[%c168, %c0_4] : memref<304x128xf32, #tpu.memory_space<vmem>>, vector<128x128xf32>
    %c296 = arith.constant 296 : index
    %c0_5 = arith.constant 0 : index
    %5 = vector.load %arg2[%c296, %c0_5] : memref<304x128xf32, #tpu.memory_space<vmem>>, vector<1x128xf32>
    %c0_6 = arith.constant 0 : index
    %c0_7 = arith.constant 0 : index
    %6 = vector.load %arg0[%c0_6, %c0_7] : memref<8x24xf32, #tpu.memory_space<vmem>>, vector<8x24xf32>
    %cst = arith.constant dense<0.000000e+00> : vector<8x128xf32>
    %7 = tpu.matmul %6, %0, %cst {dimension_numbers = #tpu.dot_dimension_numbers<[1], [0], [0], [1], [0, 0, 1, 1], [], []>} : vector<8x24xf32>, vector<24x128xf32>, vector<8x128xf32> -> vector<8x128xf32>
    %8 = vector.broadcast %1 : vector<1x128xf32> to vector<8x128xf32>
    %9 = arith.addf %7, %8 : vector<8x128xf32>
    %cst_8 = arith.constant 0.000000e+00 : f32
    %10 = vector.broadcast %cst_8 : f32 to vector<8x128xf32>
    %11 = arith.maximumf %9, %10 : vector<8x128xf32>
    %cst_9 = arith.constant dense<0.000000e+00> : vector<8x128xf32>
    %12 = tpu.matmul %11, %2, %cst_9 {dimension_numbers = #tpu.dot_dimension_numbers<[1], [0], [0], [1], [0, 0, 1, 1], [], []>} : vector<8x128xf32>, vector<128x128xf32>, vector<8x128xf32> -> vector<8x128xf32>
    %13 = vector.broadcast %3 : vector<1x128xf32> to vector<8x128xf32>
    %14 = arith.addf %12, %13 : vector<8x128xf32>
    %cst_10 = arith.constant 0.000000e+00 : f32
    %15 = vector.broadcast %cst_10 : f32 to vector<8x128xf32>
    %16 = arith.maximumf %14, %15 : vector<8x128xf32>
    %cst_11 = arith.constant dense<0.000000e+00> : vector<8x128xf32>
    %17 = tpu.matmul %16, %4, %cst_11 {dimension_numbers = #tpu.dot_dimension_numbers<[1], [0], [0], [1], [0, 0, 1, 1], [], []>} : vector<8x128xf32>, vector<128x128xf32>, vector<8x128xf32> -> vector<8x128xf32>
    %18 = vector.broadcast %5 : vector<1x128xf32> to vector<8x128xf32>
    %19 = arith.addf %17, %18 : vector<8x128xf32>
    %20 = tpu.iota {dimensions = array<i32: 1>} : vector<8x128xi32>
    %c0_12 = arith.constant 0 : index
    %c0_13 = arith.constant 0 : index
    %21 = vector.load %arg1[%c0_12, %c0_13] : memref<8x1xi32, #tpu.memory_space<vmem>>, vector<8x1xi32>
    %22 = vector.broadcast %21 : vector<8x1xi32> to vector<8x128xi32>
    %23 = arith.cmpi eq, %20, %22 : vector<8x128xi32>
    %cst_14 = arith.constant 0.000000e+00 : f32
    %24 = vector.broadcast %cst_14 : f32 to vector<8x128xf32>
    %25 = arith.select %23, %19, %24 : vector<8x128xi1>, vector<8x128xf32>
    %26 = vector.shape_cast %25 : vector<8x128xf32> to vector<1x8x128xf32>
    %cst_15 = arith.constant dense<0.000000e+00> : vector<1xf32>
    %27 = vector.multi_reduction <add>, %26, %cst_15 [1, 2] : vector<1x8x128xf32> to vector<1xf32>
    %28 = vector.shape_cast %27 : vector<1xf32> to vector<1x1x1xf32>
    %29 = vector.extract %28[0, 0, 0] : f32 from vector<1x1x1xf32>
    %cst_16 = arith.constant 0.000000e+00 : f32
    %30 = arith.subf %cst_16, %29 : f32
    %cst_17 = arith.constant 1.250000e-01 : f32
    %31 = arith.mulf %30, %cst_17 : f32
    %c0_18 = arith.constant 0 : index
    %c0_19 = arith.constant 0 : index
    %32 = memref.load %arg3[%c0_18, %c0_19] : memref<1x1xf32, #tpu.memory_space<smem>>
    memref.store %31, %arg3[%c0_18, %c0_19] : memref<1x1xf32, #tpu.memory_space<smem>>
    return
  }
}

</mosaic_0001>

<llo_original>
// kernel: tpu_custom_call.1
$region0: #{tpu_custom_call.1}
  #allocation0 [shape = 'u32[]', space=smem, size = 0x4, offset = 0x4, fixed_abs, tag = 'smem constant byte address 0x4 - core index']
  #allocation1 [shape = 'u32[72,128]{1,0:T(1,128)}', space=vmem, size = 0x9000, scoped, tag = 'internal scratch']
  %s0 = inlined_call_operand.vmem [shape: f32[8,24], index: 0, kind: input, shape index: {}]
  %s1 = inlined_call_operand.vmem [shape: s32[8,1], index: 1, kind: input, shape index: {}]
  %s2 = inlined_call_operand.hbm [shape: f32[304,128], index: 2, kind: input, shape index: {}]
  %s3 = inlined_call_operand.hbm [shape: f32[1,1], index: 3, kind: output, shape index: {}]
  %s4 = sld [smem:[#allocation0]]
  $region26: #{tpu_custom_call.1} parent=0
    _
  %s6 = ssub.s32 1, %s4
  %s7 = scalar_select 0, %s6, %s4
  $region1: #{tpu_custom_call.1} parent=0
    #allocation2 [shape = 'u8[155648]{0}', space=vmem, size = 0x26000, scoped, tag = 'input window, operand 2, single buffered']
    #allocation3 [shape = 's32[1]{0}', space=sflag, size = 0x4, scoped, tag = 'scoped memory for tpu_custom_call.1']
    #allocation4 [shape = 's32[1]{0}', space=sflag, size = 0x4, scoped, tag = 'scoped memory for tpu_custom_call.1']
    #allocation5 [shape = 'u8[512]{0}', space=smem, size = 0x200, scoped, tag = 'output window, operand 0, single buffered']
    %8 = vsyncpa [#allocation3], 0
    %9 = vsyncpa [#allocation4], 0
    // Predicated region
    $region2: #{tpu_custom_call.1} parent=1 // pred_check
      _
    $region3: #{tpu_custom_call.1} parent=1 // pred_check_branch
      %11 = sbr.rel (0) target = $region5
    $region4: #{tpu_custom_call.1} parent=1 // pred_region
      _
    $region5: #{tpu_custom_call.1} parent=1 // pred_fallthru
      _
    // Predicated region
    $region6: #{tpu_custom_call.1} parent=1 // pred_check
      _
    $region7: #{tpu_custom_call.1} parent=1 // pred_check_branch
      %13 = sbr.rel (0) target = $region9
    $region8: #{tpu_custom_call.1} parent=1 // pred_region
      _
    $region9: #{tpu_custom_call.1} parent=1 // pred_fallthru
      _
    // Predicated region
    $region10: #{tpu_custom_call.1} parent=1 // pred_check
      _
    $region11: #{tpu_custom_call.1} parent=1 // pred_check_branch
      %15 = sbr.rel (0) target = $region13
    $region12: #{tpu_custom_call.1} parent=1 // pred_region
      %17 = vsyncadd [#allocation3], 0
      %s18 = sshll.u32 %s2, 4
      %s19 = int_to_ptr.hbm [resolvable:$true] %s18
      %s20 = sshll.u32 [#allocation2], 4
      %s21 = int_to_ptr.vmem [resolvable:$true] %s20
      %26 = dma.hbm_to_vmem [thread:$0]  %s19, 4864, %s21, [#allocation3], 128, 128, 8
    $region13: #{tpu_custom_call.1} parent=1 // pred_fallthru
      _
    // Predicated region
    $region14: #{tpu_custom_call.1} parent=1 // pred_check
      _
    $region15: #{tpu_custom_call.1} parent=1 // pred_check_branch
      %28 = sbr.rel (0) target = $region17
    $region16: #{tpu_custom_call.1} parent=1 // pred_region
      %30 = dma.done [#allocation3], 4864
    $region17: #{tpu_custom_call.1} parent=1 // pred_fallthru
      _
    %v31 = vld [vmem:[#allocation2] sm:$0xff]
    %v32 = vld [vmem:[#allocation2 + $0x8] sm:$0xff]
    %v33 = vld [vmem:[#allocation2 + $0x10] sm:$0xff]
    %v34 = vld [vmem:[#allocation2 + $0x18] sm:$0x1]
    %v35 = vld [vmem:[#allocation2 + $0x20] sm:$0xff]
    %v36 = vld [vmem:[#allocation2 + $0x28] sm:$0xff]
    %v37 = vld [vmem:[#allocation2 + $0x30] sm:$0xff]
    %v38 = vld [vmem:[#allocation2 + $0x38] sm:$0xff]
    %v39 = vld [vmem:[#allocation2 + $0x40] sm:$0xff]
    %v40 = vld [vmem:[#allocation2 + $0x48] sm:$0xff]
    %v41 = vld [vmem:[#allocation2 + $0x50] sm:$0xff]
    %v42 = vld [vmem:[#allocation2 + $0x58] sm:$0xff]
    %v43 = vld [vmem:[#allocation2 + $0x60] sm:$0xff]
    %v44 = vld [vmem:[#allocation2 + $0x68] sm:$0xff]
    %v45 = vld [vmem:[#allocation2 + $0x70] sm:$0xff]
    %v46 = vld [vmem:[#allocation2 + $0x78] sm:$0xff]
    %v47 = vld [vmem:[#allocation2 + $0x80] sm:$0xff]
    %v48 = vld [vmem:[#allocation2 + $0x88] sm:$0xff]
    %v49 = vld [vmem:[#allocation2 + $0x90] sm:$0xff]
    %v50 = vld [vmem:[#allocation2 + $0x98] sm:$0xff]
    %v51 = vld [vmem:[#allocation2 + $0xa0] sm:$0x1]
    %v52 = vld [vmem:[#allocation2 + $0xa8] sm:$0xff]
    %v53 = vld [vmem:[#allocation2 + $0xb0] sm:$0xff]
    %v54 = vld [vmem:[#allocation2 + $0xb8] sm:$0xff]
    %v55 = vld [vmem:[#allocation2 + $0xc0] sm:$0xff]
    %v56 = vld [vmem:[#allocation2 + $0xc8] sm:$0xff]
    %v57 = vld [vmem:[#allocation2 + $0xd0] sm:$0xff]
    %v58 = vld [vmem:[#allocation2 + $0xd8] sm:$0xff]
    %v59 = vld [vmem:[#allocation2 + $0xe0] sm:$0xff]
    %v60 = vld [vmem:[#allocation2 + $0xe8] sm:$0xff]
    %v61 = vld [vmem:[#allocation2 + $0xf0] sm:$0xff]
    %v62 = vld [vmem:[#allocation2 + $0xf8] sm:$0xff]
    %v63 = vld [vmem:[#allocation2 + $0x100] sm:$0xff]
    %v64 = vld [vmem:[#allocation2 + $0x108] sm:$0xff]
    %v65 = vld [vmem:[#allocation2 + $0x110] sm:$0xff]
    %v66 = vld [vmem:[#allocation2 + $0x118] sm:$0xff]
    %v67 = vld [vmem:[#allocation2 + $0x120] sm:$0xff]
    %v68 = vld [vmem:[#allocation2 + $0x128] sm:$0x1]
    %v69 = vld [vmem:[%s0] sm:$0xff]
    %v70 = vperm.slane %v34, 0
    %vm71 = vcmask 195584
    %v73 = vsel %vm71, %v69, 0
    %75 = vmatpush.msra.mxu0 0.0
    %76 = vmatpush.msra.mxu0 0.0
    %77 = vmatpush.msra.mxu0 0.0
    %78 = vmatpush.msra.mxu0 0.0
    %79 = vmatpush.msra.mxu0 0.0
    %80 = vmatpush.msra.mxu0 0.0
    %81 = vmatpush.msra.mxu0 0.0
    %82 = vmatpush.msra.mxu0 0.0
    %83 = vmatpush.msra.mxu0 0.0
    %84 = vmatpush.msra.mxu0 0.0
    %85 = vmatpush.msra.mxu0 0.0
    %86 = vmatpush.msra.mxu0 0.0
    %87 = vmatpush.msra.mxu0 0.0
    %88 = vmatpush.msra.mxu0 %v33
    %89 = vmatpush.msra.mxu0 %v32
    %90 = vmatpush.msra.mxu0 %v31
    %91 = vmatmul.f32.gmra.mxu0 %v73
    %v92 = vpop.f32.mrf.mxu0
    %v93 = vadd.f32 %v70, %v92
    %94 = vdwg.mxu0
    %v95 = vmax.f32 %v93, 0.0
    %v96 = vperm.slane %v51, 0
    %97 = vmatpush.msra.mxu0 %v50
    %98 = vmatpush.msra.mxu0 %v49
    %99 = vmatpush.msra.mxu0 %v48
    %100 = vmatpush.msra.mxu0 %v47
    %101 = vmatpush.msra.mxu0 %v46
    %102 = vmatpush.msra.mxu0 %v45
    %103 = vmatpush.msra.mxu0 %v44
    %104 = vmatpush.msra.mxu0 %v43
    %105 = vmatpush.msra.mxu0 %v42
    %106 = vmatpush.msra.mxu0 %v41
    %107 = vmatpush.msra.mxu0 %v40
    %108 = vmatpush.msra.mxu0 %v39
    %109 = vmatpush.msra.mxu0 %v38
    %110 = vmatpush.msra.mxu0 %v37
    %111 = vmatpush.msra.mxu0 %v36
    %112 = vmatpush.msra.mxu0 %v35
    %113 = vmatmul.f32.gmra.mxu0 %v95
    %v114 = vpop.f32.mrf.mxu0
    %v115 = vadd.f32 %v96, %v114
    %116 = vdwg.mxu0
    %v117 = vmax.f32 %v115, 0.0
    %v118 = vperm.slane %v68, 0
    %119 = vmatpush.msra.mxu0 %v67
    %120 = vmatpush.msra.mxu0 %v66
    %121 = vmatpush.msra.mxu0 %v65
    %122 = vmatpush.msra.mxu0 %v64
    %123 = vmatpush.msra.mxu0 %v63
    %124 = vmatpush.msra.mxu0 %v62
    %125 = vmatpush.msra.mxu0 %v61
    %126 = vmatpush.msra.mxu0 %v60
    %127 = vmatpush.msra.mxu0 %v59
    %128 = vmatpush.msra.mxu0 %v58
    %129 = vmatpush.msra.mxu0 %v57
    %130 = vmatpush.msra.mxu0 %v56
    %131 = vmatpush.msra.mxu0 %v55
    %132 = vmatpush.msra.mxu0 %v54
    %133 = vmatpush.msra.mxu0 %v53
    %134 = vmatpush.msra.mxu0 %v52
    %135 = vmatmul.f32.gmra.mxu0 %v117
    %v136 = vpop.f32.mrf.mxu0
    %v137 = vadd.f32 %v118, %v136
    %138 = vdwg.mxu0
    %v139 = vlaneseq
    %v140 = vand.u32 %v139, 127
    %v141 = vld [vmem:[%s1] sm:$0xff]
    %142 = vset.pattern.permute.xlu0 0
    %143 = vperm.xlu0 %142, %v141
    %v144 = vpop.permute.xlu0 %143
    %vm145 = vcmp.eq.s32.totalorder %v140, %v144
    %v146 = vsel %vm145, %v137, 0.0
    %147 = vadd.xlane.f32.xlu0 %v146
    %v148 = vpop.xlane.xlu0 %147
    %v149 = vrot.slane %v148, 4
    %v150 = vadd.f32 %v148, %v149
    %v151 = vrot.slane %v150, 2
    %v152 = vadd.f32 %v150, %v151
    %v153 = vrot.slane %v152, 1
    %v154 = vadd.f32 %v152, %v153
    %s155 = vtos %v154
    %s156 = ssub.f32 0.0, %s155
    %s157 = smul.f32 %s156, 0.125
    %s158 = scalar_lea.smem [#allocation5], 0
    %159 = sst [smem:[%s158]] %s157
    // Predicated region
    $region18: #{tpu_custom_call.1} parent=1 // pred_check
      _
    $region19: #{tpu_custom_call.1} parent=1 // pred_check_branch
      %161 = sbr.rel (0) target = $region21
    $region20: #{tpu_custom_call.1} parent=1 // pred_region
      %163 = vsyncadd [#allocation4], 0
      %s165 = sshll.u32 %s3, 4
      %s166 = int_to_ptr.hbm [resolvable:$true] %s165
      %168 = dma.smem_to_hbm [#allocation5], 16, %s166, [#allocation4]
    $region21: #{tpu_custom_call.1} parent=1 // pred_fallthru
      _
    // Predicated region
    $region22: #{tpu_custom_call.1} parent=1 // pred_check
      _
    $region23: #{tpu_custom_call.1} parent=1 // pred_check_branch
      %170 = sbr.rel (0) target = $region25
    $region24: #{tpu_custom_call.1} parent=1 // pred_region
      %172 = dma.done [#allocation4], 16
    $region25: #{tpu_custom_call.1} parent=1 // pred_fallthru
      _
    %173 = sfence
    %174 = vsyncpa [#allocation3], 1
    %175 = vsyncpa [#allocation4], 1

</llo_original>
